<compile_context>
chip_gen: v7x
topology: tpu7x:2x2x1
jax: 0.10.0
libtpu: 0.0.40
codegen_flags: <defaults>
</compile_context>

<pallas_src>
import functools
import math

import jax
import jax.numpy as jnp
from jax.experimental import pallas as pl
from jax.experimental.pallas import tpu as pltpu

_LANE = 128


def _round_up(x, m):
    return ((x + m - 1) // m) * m


def _tail_chain_kernel(n_layers, x_ref, w_ref, o_ref):
    """x_ref: (block_m, P) activation block (bias channel = 1.0 at lane P-1).
    w_ref: (n_layers, P, P) packed augmented weights (resident across grid steps).
    o_ref: (block_m, P) lane-dense output block (real outputs in the leading cols).
    """
    h = x_ref[...]
    for i in range(n_layers):
        h = jnp.dot(h, w_ref[i], preferred_element_type=jnp.float32)
    o_ref[...] = h


def pack_tail_params(tail_weights_t, tail_biases, feat):
    """Pack all Linear layers into one (n_layers, P, P) f32 slab with biases folded in.

    tail_weights_t: list of (in_features, out_features) arrays (PyTorch W transposed).
    tail_biases:    list of (out_features,) arrays.
    """
    dims = [feat] + [int(w.shape[1]) for w in tail_weights_t]
    # +1 reserves a spare lane for the bias channel at index P-1.
    P = _round_up(max(dims) + 1, _LANE)
    n_layers = len(tail_weights_t)
    slab = jnp.zeros((n_layers, P, P), jnp.float32)
    for i, (w, b) in enumerate(zip(tail_weights_t, tail_biases)):
        fin, fout = int(w.shape[0]), int(w.shape[1])
        slab = slab.at[i, :fin, :fout].set(w.astype(jnp.float32))
        slab = slab.at[i, P - 1, :fout].set(b.astype(jnp.float32))
        slab = slab.at[i, P - 1, P - 1].set(1.0)  # propagate the bias channel
    return slab, P


def memory_model_forward(lstm_h, w_slab, out_dim, *, block_m=None):
    """Pallas implementation of MemoryModel.forward() over a (seq, batch, hidden) state.

    lstm_h: (seq, batch, hidden_n)  -- self.lstm_state[0] (or a stack of such states)
    w_slab: (n_layers, P, P) packed augmented tail weights from pack_tail_params()
    returns (seq, batch, out_dim) float32
    """
    seq, batch, feat = lstm_h.shape
    m = seq * batch
    n_layers, P, _ = w_slab.shape

    if block_m is None:
        # small M: a single sublane-aligned block; large M: 64-row blocks so the
        # grid has >1 step (megacore sharding on v7x, weights stay resident).
        block_m = 64 if m > 64 else _round_up(max(m, 1), 8)
    m_pad = _round_up(m, block_m)

    x = lstm_h.reshape(m, feat).astype(jnp.float32)
    x_aug = jnp.zeros((m_pad, P), jnp.float32)
    x_aug = x_aug.at[:m, :feat].set(x)
    x_aug = x_aug.at[:m, P - 1].set(1.0)  # bias channel (padded rows stay 0 -> output 0)

    grid = (m_pad // block_m,)
    flops = 2 * m_pad * P * P * n_layers
    bytes_accessed = 4 * (2 * m_pad * P + n_layers * P * P)

    kernel = functools.partial(_tail_chain_kernel, n_layers)
    out = pl.pallas_call(
        kernel,
        out_shape=jax.ShapeDtypeStruct((m_pad, P), jnp.float32),
        grid_spec=pltpu.PrefetchScalarGridSpec(
            num_scalar_prefetch=0,
            grid=grid,
            in_specs=[
                pl.BlockSpec((block_m, P), lambda i: (i, 0)),
                # constant block index -> packed weights loaded once, reused every step
                pl.BlockSpec((n_layers, P, P), lambda i: (0, 0, 0)),
            ],
            out_specs=pl.BlockSpec((block_m, P), lambda i: (i, 0)),
        ),
        compiler_params=pltpu.CompilerParams(
            dimension_semantics=("parallel",)),
        cost_estimate=pl.CostEstimate(
            flops=flops, transcendentals=0, bytes_accessed=bytes_accessed),
    )(x_aug, w_slab)

    return out[:m, :out_dim].reshape(seq, batch, out_dim)


def _init_linear(key, in_features, out_features):
    """Deterministic init mirroring nn.Linear's default (uniform +-1/sqrt(fan_in)).

    Returns W already transposed to (in_features, out_features), and bias (out_features,).
    """
    kw, kb = jax.random.split(key)
    bound = 1.0 / math.sqrt(in_features)
    w_t = jax.random.uniform(kw, (in_features, out_features), jnp.float32, -bound, bound)
    b = jax.random.uniform(kb, (out_features,), jnp.float32, -bound, bound)
    return w_t, b


if __name__ == "__main__":
    hidden_n = 32
    loop_n = 16                      # loop_layers exist in __init__ but unused in forward()
    tail_arch = [hidden_n, 64, 16]   # tail_arch[0] matches hidden state feature dim
    out_dim = tail_arch[-1]

    key = jax.random.PRNGKey(0)
    k_state, k_params, k_batch = jax.random.split(key, 3)

    # tail_layers parameters (deterministic, synthetic), packed once.
    tail_weights_t, tail_biases = [], []
    keys = jax.random.split(k_params, len(tail_arch) - 1)
    for i in range(len(tail_arch) - 1):
        w_t, b = _init_linear(keys[i], tail_arch[i], tail_arch[i + 1])
        tail_weights_t.append(w_t)
        tail_biases.append(b)
    w_slab, P = pack_tail_params(tail_weights_t, tail_biases, hidden_n)

    # TODO(synk): LSTM encoder/decoder and loop_layers are never invoked by forward();
    # they are intentionally not implemented in the kernel.

    def ref_forward(h):
        s, b_, f = h.shape
        r = h.reshape(s * b_, f)
        for w_t, b in zip(tail_weights_t, tail_biases):
            r = r @ w_t + b
        return r.reshape(s, b_, out_dim)

    # 1) Exact module semantics: state_shape = (1, 1, hidden_n).
    lstm_h = jax.random.normal(k_state, (1, 1, hidden_n), jnp.float32)
    out = jax.block_until_ready(memory_model_forward(lstm_h, w_slab, out_dim))
    assert out.shape == (1, 1, out_dim), out.shape
    assert jnp.allclose(out, ref_forward(lstm_h), atol=1e-4, rtol=1e-4)

    # 2) Batched path: many (timestep, sample) hidden states through ONE pallas_call.
    lstm_h_batched = jax.random.normal(k_batch, (8, 16, hidden_n), jnp.float32)
    out_b = jax.block_until_ready(memory_model_forward(lstm_h_batched, w_slab, out_dim))
    assert out_b.shape == (8, 16, out_dim), out_b.shape
    assert jnp.allclose(out_b, ref_forward(lstm_h_batched), atol=1e-4, rtol=1e-4)

    print("KERNEL_OK")
</pallas_src>

<mosaic_0001>
module attributes {stable_mosaic.version = 11 : i64} {
  func.func @_tail_chain_kernel(%arg0: i32, %arg1: memref<8x128xf32, #tpu.memory_space<vmem>>, %arg2: memref<2x128x128xf32, #tpu.memory_space<vmem>>, %arg3: memref<8x128xf32, #tpu.memory_space<vmem>>) attributes {dimension_semantics = [#tpu.dimension_semantics<parallel>], iteration_bounds = array<i64: 1>, scalar_prefetch = 0 : i64, scratch_operands = 0 : i64, tpu.core_type = #tpu.core_type<tc>, window_params = [{transform_indices = @transform_0, window_bounds = array<i64: 8, 128>}, {pipeline_mode = #tpu.pipeline_mode<synchronous>, transform_indices = @transform_1, window_bounds = array<i64: 2, 128, 128>}, {transform_indices = @transform_2, window_bounds = array<i64: 8, 128>}]} {
    %c0 = arith.constant 0 : index
    %c0_0 = arith.constant 0 : index
    %0 = vector.load %arg1[%c0, %c0_0] : memref<8x128xf32, #tpu.memory_space<vmem>>, vector<8x128xf32>
    %c0_1 = arith.constant 0 : index
    %c0_2 = arith.constant 0 : index
    %c0_3 = arith.constant 0 : index
    %1 = vector.load %arg2[%c0_1, %c0_2, %c0_3] : memref<2x128x128xf32, #tpu.memory_space<vmem>>, vector<1x128x128xf32>
    %2 = vector.shape_cast %1 : vector<1x128x128xf32> to vector<128x128xf32>
    %cst = arith.constant dense<0.000000e+00> : vector<8x128xf32>
    %3 = tpu.matmul %0, %2, %cst {dimension_numbers = #tpu.dot_dimension_numbers<[1], [0], [0], [1], [0, 0, 1, 1], [], []>} : vector<8x128xf32>, vector<128x128xf32>, vector<8x128xf32> -> vector<8x128xf32>
    %c1 = arith.constant 1 : index
    %c0_4 = arith.constant 0 : index
    %c0_5 = arith.constant 0 : index
    %4 = vector.load %arg2[%c1, %c0_4, %c0_5] : memref<2x128x128xf32, #tpu.memory_space<vmem>>, vector<1x128x128xf32>
    %5 = vector.shape_cast %4 : vector<1x128x128xf32> to vector<128x128xf32>
    %cst_6 = arith.constant dense<0.000000e+00> : vector<8x128xf32>
    %6 = tpu.matmul %3, %5, %cst_6 {dimension_numbers = #tpu.dot_dimension_numbers<[1], [0], [0], [1], [0, 0, 1, 1], [], []>} : vector<8x128xf32>, vector<128x128xf32>, vector<8x128xf32> -> vector<8x128xf32>
    %c0_7 = arith.constant 0 : index
    %c0_8 = arith.constant 0 : index
    %7 = vector.load %arg3[%c0_7, %c0_8] : memref<8x128xf32, #tpu.memory_space<vmem>>, vector<8x128xf32>
    tpu.vector_store %arg3[%c0_7, %c0_8], %6 {strides = array<i32>} : memref<8x128xf32, #tpu.memory_space<vmem>>, vector<8x128xf32>,
    return
  }
  func.func @transform_0(%arg0: i32) -> (i32, i32) {
    %c0_i32 = arith.constant 0 : i32
    %c0_i32_0 = arith.constant 0 : i32
    return %arg0, %c0_i32 : i32, i32
  }
  func.func @transform_1(%arg0: i32) -> (i32, i32, i32) {
    %c0_i32 = arith.constant 0 : i32
    %c0_i32_0 = arith.constant 0 : i32
    %c0_i32_1 = arith.constant 0 : i32
    %c0_i32_2 = arith.constant 0 : i32
    return %c0_i32, %c0_i32_0, %c0_i32_1 : i32, i32, i32
  }
  func.func @transform_2(%arg0: i32) -> (i32, i32) {
    %c0_i32 = arith.constant 0 : i32
    %c0_i32_0 = arith.constant 0 : i32
    return %arg0, %c0_i32 : i32, i32
  }
}

</mosaic_0001>

<llo_original>
// kernel: tpu_custom_call.1
$region0: #{tpu_custom_call.1}
  #allocation0 [shape = 'u32[]', space=smem, size = 0x4, offset = 0x4, fixed_abs, tag = 'smem constant byte address 0x4 - core index']
  #allocation1 [shape = 'u32[144,128]{1,0:T(1,128)}', space=vmem, size = 0x12000, scoped, tag = 'internal scratch']
  %s0 = inlined_call_operand.hbm [shape: f32[8,128], index: 0, kind: input, shape index: {}]
  %s1 = inlined_call_operand.hbm [shape: f32[2,128,128], index: 1, kind: input, shape index: {}]
  %s2 = inlined_call_operand.hbm [shape: f32[8,128], index: 2, kind: output, shape index: {}]
  %s3 = sld [smem:[#allocation0]]
  $region26: #{tpu_custom_call.1} parent=0
    _
  %s5 = ssub.s32 1, %s3
  %s6 = scalar_select 0, %s5, %s3
  $region1: #{tpu_custom_call.1} parent=0
    #allocation2 [shape = 'u8[4096]{0}', space=vmem, size = 0x1000, scoped, tag = 'input window, operand 0, single buffered']
    #allocation3 [shape = 's32[1]{0}', space=sflag, size = 0x4, scoped, tag = 'scoped memory for tpu_custom_call.1']
    #allocation4 [shape = 's32[1]{0}', space=sflag, size = 0x4, scoped, tag = 'scoped memory for tpu_custom_call.1']
    #allocation5 [shape = 'u8[131072]{0}', space=vmem, size = 0x20000, scoped, tag = 'input window, operand 1, single buffered']
    #allocation6 [shape = 's32[1]{0}', space=sflag, size = 0x4, scoped, tag = 'scoped memory for tpu_custom_call.1']
    #allocation7 [shape = 'u8[4096]{0}', space=vmem, size = 0x1000, scoped, tag = 'output window, operand 0, single buffered']
    %7 = vsyncpa [#allocation3], 0
    %8 = vsyncpa [#allocation6], 0
    %9 = vsyncpa [#allocation4], 0
    // Predicated region
    $region2: #{tpu_custom_call.1} parent=1 // pred_check
      _
    $region3: #{tpu_custom_call.1} parent=1 // pred_check_branch
      %11 = sbr.rel (0) target = $region5
    $region4: #{tpu_custom_call.1} parent=1 // pred_region
      %s13 = ssub.s32 128, 128
      %14 = vsyncadd [#allocation3], %s13
      %s16 = sshll.u32 [#allocation2], 4
      %s17 = int_to_ptr.vmem [resolvable:$true] %s16
      %19 = dma.hbm_to_vmem [thread:$0]  %s0, 128, %s17, [#allocation3]
    $region5: #{tpu_custom_call.1} parent=1 // pred_fallthru
      _
    // Predicated region
    $region6: #{tpu_custom_call.1} parent=1 // pred_check
      _
    $region7: #{tpu_custom_call.1} parent=1 // pred_check_branch
      %21 = sbr.rel (0) target = $region9
    $region8: #{tpu_custom_call.1} parent=1 // pred_region
      %s23 = ssub.s32 4096, 4096
      %24 = vsyncadd [#allocation6], %s23
      %s25 = sshll.u32 [#allocation5], 4
      %s26 = int_to_ptr.vmem [resolvable:$true] %s25
      %31 = dma.hbm_to_vmem [thread:$0]  %s1, 4096, %s26, [#allocation6], 128, 128, 8
    $region9: #{tpu_custom_call.1} parent=1 // pred_fallthru
      _
    // Predicated region
    $region10: #{tpu_custom_call.1} parent=1 // pred_check
      _
    $region11: #{tpu_custom_call.1} parent=1 // pred_check_branch
      %33 = sbr.rel (0) target = $region13
    $region12: #{tpu_custom_call.1} parent=1 // pred_region
      %34 = dma.done [#allocation3], 128
    $region13: #{tpu_custom_call.1} parent=1 // pred_fallthru
      _
    // Predicated region
    $region14: #{tpu_custom_call.1} parent=1 // pred_check
      _
    $region15: #{tpu_custom_call.1} parent=1 // pred_check_branch
      %36 = sbr.rel (0) target = $region17
    $region16: #{tpu_custom_call.1} parent=1 // pred_region
      %37 = dma.done [#allocation6], 4096
    $region17: #{tpu_custom_call.1} parent=1 // pred_fallthru
      _
    %v38 = vld [vmem:[#allocation2] sm:$0xff]
    %v39 = vld [vmem:[#allocation5] sm:$0xff]
    %v40 = vld [vmem:[#allocation5 + $0x8] sm:$0xff]
    %v41 = vld [vmem:[#allocation5 + $0x10] sm:$0xff]
    %v42 = vld [vmem:[#allocation5 + $0x18] sm:$0xff]
    %v43 = vld [vmem:[#allocation5 + $0x20] sm:$0xff]
    %v44 = vld [vmem:[#allocation5 + $0x28] sm:$0xff]
    %v45 = vld [vmem:[#allocation5 + $0x30] sm:$0xff]
    %v46 = vld [vmem:[#allocation5 + $0x38] sm:$0xff]
    %v47 = vld [vmem:[#allocation5 + $0x40] sm:$0xff]
    %v48 = vld [vmem:[#allocation5 + $0x48] sm:$0xff]
    %v49 = vld [vmem:[#allocation5 + $0x50] sm:$0xff]
    %v50 = vld [vmem:[#allocation5 + $0x58] sm:$0xff]
    %v51 = vld [vmem:[#allocation5 + $0x60] sm:$0xff]
    %v52 = vld [vmem:[#allocation5 + $0x68] sm:$0xff]
    %v53 = vld [vmem:[#allocation5 + $0x70] sm:$0xff]
    %v54 = vld [vmem:[#allocation5 + $0x78] sm:$0xff]
    %55 = vmatprep.subr.mxu0 0.0
    %56 = vmatpush1.msra.mxu0 %v39
    %57 = vmatprep.subr.mxu0 0.0
    %58 = vmatpush1.msra.mxu0 %v40
    %59 = vmatprep.subr.mxu0 0.0
    %60 = vmatpush1.msra.mxu0 %v41
    %61 = vmatprep.subr.mxu0 0.0
    %62 = vmatpush1.msra.mxu0 %v42
    %63 = vmatprep.subr.mxu0 0.0
    %64 = vmatpush1.msra.mxu0 %v43
    %65 = vmatprep.subr.mxu0 0.0
    %66 = vmatpush1.msra.mxu0 %v44
    %67 = vmatprep.subr.mxu0 0.0
    %68 = vmatpush1.msra.mxu0 %v45
    %69 = vmatprep.subr.mxu0 0.0
    %70 = vmatpush1.msra.mxu0 %v46
    %71 = vmatprep.subr.mxu0 0.0
    %72 = vmatpush1.msra.mxu0 %v47
    %73 = vmatprep.subr.mxu0 0.0
    %74 = vmatpush1.msra.mxu0 %v48
    %75 = vmatprep.subr.mxu0 0.0
    %76 = vmatpush1.msra.mxu0 %v49
    %77 = vmatprep.subr.mxu0 0.0
    %78 = vmatpush1.msra.mxu0 %v50
    %79 = vmatprep.subr.mxu0 0.0
    %80 = vmatpush1.msra.mxu0 %v51
    %81 = vmatprep.subr.mxu0 0.0
    %82 = vmatpush1.msra.mxu0 %v52
    %83 = vmatprep.subr.mxu0 0.0
    %84 = vmatpush1.msra.mxu0 %v53
    %85 = vmatprep.subr.mxu0 0.0
    %86 = vmatpush1.msra.mxu0 %v54
    %87 = vmatprep.subr.mxu0 0.0
    %88 = vmatpush1.msra.mxu0 0.0
    %89 = vmatprep.subr.mxu0 0.0
    %90 = vmatpush1.msra.mxu0 0.0
    %91 = vmatprep.subr.mxu0 0.0
    %92 = vmatpush1.msra.mxu0 0.0
    %93 = vmatprep.subr.mxu0 0.0
    %94 = vmatpush1.msra.mxu0 0.0
    %95 = vmatprep.subr.mxu0 0.0
    %96 = vmatpush1.msra.mxu0 0.0
    %97 = vmatprep.subr.mxu0 0.0
    %98 = vmatpush1.msra.mxu0 0.0
    %99 = vmatprep.subr.mxu0 0.0
    %100 = vmatpush1.msra.mxu0 0.0
    %101 = vmatprep.subr.mxu0 0.0
    %102 = vmatpush1.msra.mxu0 0.0
    %103 = vmatprep.subr.mxu0 0.0
    %104 = vmatpush1.msra.mxu0 0.0
    %105 = vmatprep.subr.mxu0 0.0
    %106 = vmatpush1.msra.mxu0 0.0
    %107 = vmatprep.subr.mxu0 0.0
    %108 = vmatpush1.msra.mxu0 0.0
    %109 = vmatprep.subr.mxu0 0.0
    %110 = vmatpush1.msra.mxu0 0.0
    %111 = vmatprep.subr.mxu0 0.0
    %112 = vmatpush1.msra.mxu0 0.0
    %113 = vmatprep.subr.mxu0 0.0
    %114 = vmatpush1.msra.mxu0 0.0
    %115 = vmatprep.subr.mxu0 0.0
    %116 = vmatpush1.msra.mxu0 0.0
    %117 = vmatprep.subr.mxu0 0.0
    %118 = vmatpush1.msra.mxu0 0.0
    %119 = vmatprep.mubr.f32.mxu0 0.0
    %120 = vmatmul.mubr.f32.gmra.mrb[0].mxu0 %v38
    %v121 = vpop.f32.mrb[0].mxu0
    %v122 = vadd.f32 0.0, %v121
    %v123 = vpop.f32.mrb[0].mxu0
    %124 = vdwg.mxu0
    %s125 = scalar_lea.vmem [#allocation5], 128
    %v126 = vld [vmem:[%s125] sm:$0xff]
    %v127 = vld [vmem:[%s125 + $0x8] sm:$0xff]
    %v128 = vld [vmem:[%s125 + $0x10] sm:$0xff]
    %v129 = vld [vmem:[%s125 + $0x18] sm:$0xff]
    %v130 = vld [vmem:[%s125 + $0x20] sm:$0xff]
    %v131 = vld [vmem:[%s125 + $0x28] sm:$0xff]
    %v132 = vld [vmem:[%s125 + $0x30] sm:$0xff]
    %v133 = vld [vmem:[%s125 + $0x38] sm:$0xff]
    %v134 = vld [vmem:[%s125 + $0x40] sm:$0xff]
    %v135 = vld [vmem:[%s125 + $0x48] sm:$0xff]
    %v136 = vld [vmem:[%s125 + $0x50] sm:$0xff]
    %v137 = vld [vmem:[%s125 + $0x58] sm:$0xff]
    %v138 = vld [vmem:[%s125 + $0x60] sm:$0xff]
    %v139 = vld [vmem:[%s125 + $0x68] sm:$0xff]
    %v140 = vld [vmem:[%s125 + $0x70] sm:$0xff]
    %v141 = vld [vmem:[%s125 + $0x78] sm:$0xff]
    %142 = vmatprep.subr.mxu0 0.0
    %143 = vmatpush1.msra.mxu0 %v126
    %144 = vmatprep.subr.mxu0 0.0
    %145 = vmatpush1.msra.mxu0 %v127
    %146 = vmatprep.subr.mxu0 0.0
    %147 = vmatpush1.msra.mxu0 %v128
    %148 = vmatprep.subr.mxu0 0.0
    %149 = vmatpush1.msra.mxu0 %v129
    %150 = vmatprep.subr.mxu0 0.0
    %151 = vmatpush1.msra.mxu0 %v130
    %152 = vmatprep.subr.mxu0 0.0
    %153 = vmatpush1.msra.mxu0 %v131
    %154 = vmatprep.subr.mxu0 0.0
    %155 = vmatpush1.msra.mxu0 %v132
    %156 = vmatprep.subr.mxu0 0.0
    %157 = vmatpush1.msra.mxu0 %v133
    %158 = vmatprep.subr.mxu0 0.0
    %159 = vmatpush1.msra.mxu0 %v134
    %160 = vmatprep.subr.mxu0 0.0
    %161 = vmatpush1.msra.mxu0 %v135
    %162 = vmatprep.subr.mxu0 0.0
    %163 = vmatpush1.msra.mxu0 %v136
    %164 = vmatprep.subr.mxu0 0.0
    %165 = vmatpush1.msra.mxu0 %v137
    %166 = vmatprep.subr.mxu0 0.0
    %167 = vmatpush1.msra.mxu0 %v138
    %168 = vmatprep.subr.mxu0 0.0
    %169 = vmatpush1.msra.mxu0 %v139
    %170 = vmatprep.subr.mxu0 0.0
    %171 = vmatpush1.msra.mxu0 %v140
    %172 = vmatprep.subr.mxu0 0.0
    %173 = vmatpush1.msra.mxu0 %v141
    %174 = vmatprep.subr.mxu0 0.0
    %175 = vmatpush1.msra.mxu0 0.0
    %176 = vmatprep.subr.mxu0 0.0
    %177 = vmatpush1.msra.mxu0 0.0
    %178 = vmatprep.subr.mxu0 0.0
    %179 = vmatpush1.msra.mxu0 0.0
    %180 = vmatprep.subr.mxu0 0.0
    %181 = vmatpush1.msra.mxu0 0.0
    %182 = vmatprep.subr.mxu0 0.0
    %183 = vmatpush1.msra.mxu0 0.0
    %184 = vmatprep.subr.mxu0 0.0
    %185 = vmatpush1.msra.mxu0 0.0
    %186 = vmatprep.subr.mxu0 0.0
    %187 = vmatpush1.msra.mxu0 0.0
    %188 = vmatprep.subr.mxu0 0.0
    %189 = vmatpush1.msra.mxu0 0.0
    %190 = vmatprep.subr.mxu0 0.0
    %191 = vmatpush1.msra.mxu0 0.0
    %192 = vmatprep.subr.mxu0 0.0
    %193 = vmatpush1.msra.mxu0 0.0
    %194 = vmatprep.subr.mxu0 0.0
    %195 = vmatpush1.msra.mxu0 0.0
    %196 = vmatprep.subr.mxu0 0.0
    %197 = vmatpush1.msra.mxu0 0.0
    %198 = vmatprep.subr.mxu0 0.0
    %199 = vmatpush1.msra.mxu0 0.0
    %200 = vmatprep.subr.mxu0 0.0
    %201 = vmatpush1.msra.mxu0 0.0
    %202 = vmatprep.subr.mxu0 0.0
    %203 = vmatpush1.msra.mxu0 0.0
    %204 = vmatprep.subr.mxu0 0.0
    %205 = vmatpush1.msra.mxu0 0.0
    %206 = vmatprep.mubr.f32.mxu0 0.0
    %207 = vmatmul.mubr.f32.gmra.mrb[0].mxu0 %v122
    %v208 = vpop.f32.mrb[0].mxu0
    %v209 = vadd.f32 0.0, %v208
    %v210 = vpop.f32.mrb[0].mxu0
    %211 = vdwg.mxu0
    %212 = vst [vmem:[#allocation7] sm:$0xff] %v209
    // Predicated region
    $region18: #{tpu_custom_call.1} parent=1 // pred_check
      _
    $region19: #{tpu_custom_call.1} parent=1 // pred_check_branch
      %214 = sbr.rel (0) target = $region21
    $region20: #{tpu_custom_call.1} parent=1 // pred_region
      %s216 = ssub.s32 128, 128
      %217 = vsyncadd [#allocation4], %s216
      %s219 = sshll.u32 [#allocation7], 4
      %s220 = int_to_ptr.vmem [resolvable:$true] %s219
      %222 = dma.vmem_to_hbm [thread:$0]  %s220, 128, %s2, [#allocation4]
    $region21: #{tpu_custom_call.1} parent=1 // pred_fallthru
      _
    // Predicated region
    $region22: #{tpu_custom_call.1} parent=1 // pred_check
      _
    $region23: #{tpu_custom_call.1} parent=1 // pred_check_branch
      %224 = sbr.rel (0) target = $region25
    $region24: #{tpu_custom_call.1} parent=1 // pred_region
      %225 = dma.done [#allocation4], 128
    $region25: #{tpu_custom_call.1} parent=1 // pred_fallthru
      _
    %226 = vsyncpa [#allocation3], 1
    %227 = vsyncpa [#allocation6], 1
    %228 = vsyncpa [#allocation4], 1

</llo_original>
